<compile_context>
chip_gen: v6e
topology: v6e:2x2x1
jax: 0.10.0
libtpu: 0.0.40
codegen_flags: <defaults>
</compile_context>

<pallas_src>
import jax
import jax.numpy as jnp
from jax.experimental import pallas as pl
from jax.experimental.pallas import tpu as pltpu

BATCH_SIZE = 16
N_CLASS = 10
TIME_STEPS = 5
FEAT_DIM = 32   # FEAT_DIM is external to the original snippet; fixed small here.


def top_gru_kernel(xT_ref,        # (F, T*B)  input, batch-on-lanes
                   w_ih_ref,      # (8, F)    rows 0:6 = [rf, rb, zf, zb, nf, nb]
                   p_ref,         # (N_CLASS, 4 + 2T) packed small params
                   scores_ref,    # (N_CLASS, B) logits (transposed back in wrapper)
                   labels_ref):   # (1, B) int32
    T, B, C = TIME_STEPS, BATCH_SIZE, N_CLASS

    # --- unpack the small-param slab (static slices, loop-invariant hoists) ---
    p = p_ref[...]                               # (C, 4 + 2T)
    b_ih = p[0:6, 0:1]                           # (6, 1)
    w_hh = p[0:6, 1:2]                           # (6, 1)
    b_hh = p[0:6, 2:3]                           # (6, 1)
    b_out = p[:, 3:4]                            # (C, 1)
    w_out_f = p[:, 4:4 + T]                      # (C, T): Linear cols 2t (forward)
    w_out_b = p[:, 4 + T:4 + 2 * T]              # (C, T): Linear cols 2t+1 (backward)

    # --- one MXU pass: input-gate pre-activations for all timesteps x both dirs ---
    gi_all = jnp.dot(w_ih_ref[...], xT_ref[...],
                     preferred_element_type=jnp.float32)[0:6, :] + b_ih   # (6, T*B)

    w_hh_rz, b_hh_rz = w_hh[0:4, :], b_hh[0:4, :]     # (4, 1)
    w_hh_n, b_hh_n = w_hh[4:6, :], b_hh[4:6, :]       # (2, 1)
    # even sublanes carry the forward direction, odd sublanes the backward one
    fwd_rows = (jax.lax.broadcasted_iota(jnp.int32, (6, B), 0) % 2) == 0

    h = jnp.zeros((2, B), jnp.float32)       # rows [h_fwd, h_bwd], batch on lanes
    acc = jnp.zeros((C, B), jnp.float32)     # logits accumulator (bias added at end)

    for i in range(T):
        tf = i              # forward direction consumes x[tf]
        tb = T - 1 - i      # backward direction consumes x[tb]
        gi_f = gi_all[:, tf * B:(tf + 1) * B]                  # (6, B)
        gi_b = gi_all[:, tb * B:(tb + 1) * B]
        gi = jnp.where(fwd_rows, gi_f, gi_b)                   # (6, B)

        # merged r/z: ONE sigmoid push over a (4, B) slab
        h2 = jnp.concatenate([h, h], axis=0)                   # (4, B) [hf, hb, hf, hb]
        rz = jax.nn.sigmoid(gi[0:4, :] + h2 * w_hh_rz + b_hh_rz)
        r, z = rz[0:2, :], rz[2:4, :]                          # (2, B) each
        n = jnp.tanh(gi[4:6, :] + r * (h * w_hh_n + b_hh_n))   # (2, B)
        h = (1.0 - z) * n + z * h                              # (2, B)

        # per-step broadcast MAC into logits (replaces concat + output matmul)
        acc = acc + h[0:1, :] * w_out_f[:, tf:tf + 1]          # forward hidden at t=tf
        acc = acc + h[1:2, :] * w_out_b[:, tb:tb + 1]          # backward hidden at t=tb

    scores = acc + b_out                                       # (C, B) logits
    scores_ref[...] = scores

    # classifier: argmax(softmax(s), axis=class) == argmax(s) (first max index)
    rowidx = jax.lax.broadcasted_iota(jnp.int32, (C, B), 0)
    cmax = jnp.max(scores, axis=0, keepdims=True)              # (1, B)
    masked = jnp.where(scores == cmax, rowidx, jnp.int32(C))
    labels_ref[...] = jnp.min(masked, axis=0, keepdims=True).astype(jnp.int32)


def init_params(key):
    """Deterministic params (PyTorch GRU/Linear shapes), pre-packed into 2 slabs."""
    ks = jax.random.split(key, 10)
    k_gru = 1.0                                           # 1/sqrt(hidden_size), H == 1
    k_lin = 1.0 / jnp.sqrt(jnp.float32(TIME_STEPS * 2))

    def u(k, shape, bound):
        return jax.random.uniform(k, shape, jnp.float32, -bound, bound)

    # PyTorch shapes: weight_ih_l0 (3H, F) rows [r,z,n], weight_hh_l0 (3H, H), biases (3H,)
    w_ih_f = u(ks[0], (3, FEAT_DIM), k_gru)
    w_hh_f = u(ks[1], (3, 1), k_gru)
    b_ih_f = u(ks[2], (3,), k_gru)
    b_hh_f = u(ks[3], (3,), k_gru)
    w_ih_b = u(ks[4], (3, FEAT_DIM), k_gru)
    w_hh_b = u(ks[5], (3, 1), k_gru)
    b_ih_b = u(ks[6], (3,), k_gru)
    b_hh_b = u(ks[7], (3,), k_gru)
    # Linear: weight (N_CLASS, 2T), bias (N_CLASS,)
    w_out = u(ks[8], (N_CLASS, TIME_STEPS * 2), k_lin)
    b_out = u(ks[9], (N_CLASS,), k_lin)

    # Slab 1: input-gate weights, gate rows interleaved by direction
    # [rf, rb, zf, zb, nf, nb], padded to 8 sublanes.
    w_ih_rows = jnp.stack([w_ih_f[0], w_ih_b[0], w_ih_f[1], w_ih_b[1],
                           w_ih_f[2], w_ih_b[2]], axis=0)                    # (6, F)
    w_ih_p = jnp.zeros((8, FEAT_DIM), jnp.float32).at[0:6, :].set(w_ih_rows)

    b_ih_cat = jnp.stack([b_ih_f[0], b_ih_b[0], b_ih_f[1], b_ih_b[1],
                          b_ih_f[2], b_ih_b[2]])
    w_hh_cat = jnp.stack([w_hh_f[0, 0], w_hh_b[0, 0], w_hh_f[1, 0], w_hh_b[1, 0],
                          w_hh_f[2, 0], w_hh_b[2, 0]])
    b_hh_cat = jnp.stack([b_hh_f[0], b_hh_b[0], b_hh_f[1], b_hh_b[1],
                          b_hh_f[2], b_hh_b[2]])

    # Slab 2: all remaining small params packed into one (N_CLASS, 4 + 2T) array:
    #   col 0 = b_ih, col 1 = w_hh, col 2 = b_hh (rows 0:6),
    #   col 3 = b_out, cols 4:4+T = W_out[:, 0::2] (forward),
    #   cols 4+T:4+2T = W_out[:, 1::2] (backward).
    # Flattened bidirectional GRU output per batch is [f0,b0,f1,b1,...]:
    #   Linear col 2t   -> forward hidden at t ; Linear col 2t+1 -> backward hidden at t.
    p_slab = jnp.zeros((N_CLASS, 4 + 2 * TIME_STEPS), jnp.float32)
    p_slab = p_slab.at[0:6, 0].set(b_ih_cat)
    p_slab = p_slab.at[0:6, 1].set(w_hh_cat)
    p_slab = p_slab.at[0:6, 2].set(b_hh_cat)
    p_slab = p_slab.at[:, 3].set(b_out)
    p_slab = p_slab.at[:, 4:4 + TIME_STEPS].set(w_out[:, 0::2])
    p_slab = p_slab.at[:, 4 + TIME_STEPS:4 + 2 * TIME_STEPS].set(w_out[:, 1::2])

    return (w_ih_p, p_slab)


@jax.jit
def top_gru_forward(x, params):
    # x: (TIME_STEPS, BATCH_SIZE, FEAT_DIM).  Batch-on-lanes: pass x as (F, T*B).
    w_ih_p, p_slab = params
    xT = x.reshape(TIME_STEPS * BATCH_SIZE, FEAT_DIM).T          # (F, T*B)
    vmem = lambda: pl.BlockSpec(memory_space=pltpu.MemorySpace.VMEM)
    scores_t, labels = pl.pallas_call(
        top_gru_kernel,
        out_shape=(
            jax.ShapeDtypeStruct((N_CLASS, BATCH_SIZE), jnp.float32),
            jax.ShapeDtypeStruct((1, BATCH_SIZE), jnp.int32),
        ),
        in_specs=[vmem(), vmem(), vmem()],
        out_specs=(vmem(), vmem()),
        cost_estimate=pl.CostEstimate(flops=40960, transcendentals=480,
                                      bytes_accessed=13000),
    )(xT, w_ih_p, p_slab)
    return scores_t.T, labels[0]


if __name__ == "__main__":
    key = jax.random.PRNGKey(0)
    k_x, k_p = jax.random.split(key)
    # Input already in the (TIME_STEPS, BATCH, FEAT_DIM) layout the module reshapes to.
    x = jax.random.normal(k_x, (TIME_STEPS, BATCH_SIZE, FEAT_DIM), jnp.float32)
    params = init_params(k_p)

    scores, labels = top_gru_forward(x, params)
    jax.block_until_ready((scores, labels))

    assert scores.shape == (BATCH_SIZE, N_CLASS)
    assert labels.shape == (BATCH_SIZE,)
    assert bool(jnp.all(jnp.isfinite(scores)))
    # In-kernel argmax must agree with argmax on the returned logits
    # (argmax(softmax(s)) == argmax(s), so this matches the module's labels).
    assert bool(jnp.all(labels == jnp.argmax(scores, axis=1)))
    print("KERNEL_OK")
</pallas_src>

<mosaic_0001>
module attributes {stable_mosaic.version = 11 : i64} {
  func.func @top_gru_kernel(%arg0: memref<32x80xf32, #tpu.memory_space<vmem>>, %arg1: memref<8x32xf32, #tpu.memory_space<vmem>>, %arg2: memref<10x14xf32, #tpu.memory_space<vmem>>, %arg3: memref<10x16xf32, #tpu.memory_space<vmem>>, %arg4: memref<1x16xi32, #tpu.memory_space<vmem>>) attributes {dimension_semantics = [], scalar_prefetch = 0 : i64, scratch_operands = 0 : i64, tpu.core_type = #tpu.core_type<tc>} {
    %c0 = arith.constant 0 : index
    %c0_0 = arith.constant 0 : index
    %0 = vector.load %arg2[%c0, %c0_0] : memref<10x14xf32, #tpu.memory_space<vmem>>, vector<10x14xf32>
    %1 = vector.extract_strided_slice %0 {offsets = [0, 0], sizes = [6, 1], strides = [1, 1]} : vector<10x14xf32> to vector<6x1xf32>
    %2 = vector.extract_strided_slice %0 {offsets = [0, 1], sizes = [6, 1], strides = [1, 1]} : vector<10x14xf32> to vector<6x1xf32>
    %3 = vector.extract_strided_slice %0 {offsets = [0, 2], sizes = [6, 1], strides = [1, 1]} : vector<10x14xf32> to vector<6x1xf32>
    %4 = vector.extract_strided_slice %0 {offsets = [0, 3], sizes = [10, 1], strides = [1, 1]} : vector<10x14xf32> to vector<10x1xf32>
    %5 = vector.extract_strided_slice %0 {offsets = [0, 4], sizes = [10, 5], strides = [1, 1]} : vector<10x14xf32> to vector<10x5xf32>
    %6 = vector.extract_strided_slice %0 {offsets = [0, 9], sizes = [10, 5], strides = [1, 1]} : vector<10x14xf32> to vector<10x5xf32>
    %c0_1 = arith.constant 0 : index
    %c0_2 = arith.constant 0 : index
    %7 = vector.load %arg1[%c0_1, %c0_2] : memref<8x32xf32, #tpu.memory_space<vmem>>, vector<8x32xf32>
    %c0_3 = arith.constant 0 : index
    %c0_4 = arith.constant 0 : index
    %8 = vector.load %arg0[%c0_3, %c0_4] : memref<32x80xf32, #tpu.memory_space<vmem>>, vector<32x80xf32>
    %cst = arith.constant dense<0.000000e+00> : vector<8x80xf32>
    %9 = tpu.matmul %7, %8, %cst {dimension_numbers = #tpu.dot_dimension_numbers<[1], [0], [0], [1], [0, 0, 1, 1], [], []>} : vector<8x32xf32>, vector<32x80xf32>, vector<8x80xf32> -> vector<8x80xf32>
    %10 = vector.extract_strided_slice %9 {offsets = [0, 0], sizes = [6, 80], strides = [1, 1]} : vector<8x80xf32> to vector<6x80xf32>
    %11 = vector.broadcast %1 : vector<6x1xf32> to vector<6x80xf32>
    %12 = arith.addf %10, %11 : vector<6x80xf32>
    %13 = vector.extract_strided_slice %2 {offsets = [0, 0], sizes = [4, 1], strides = [1, 1]} : vector<6x1xf32> to vector<4x1xf32>
    %14 = vector.extract_strided_slice %3 {offsets = [0, 0], sizes = [4, 1], strides = [1, 1]} : vector<6x1xf32> to vector<4x1xf32>
    %15 = vector.extract_strided_slice %2 {offsets = [4, 0], sizes = [2, 1], strides = [1, 1]} : vector<6x1xf32> to vector<2x1xf32>
    %16 = vector.extract_strided_slice %3 {offsets = [4, 0], sizes = [2, 1], strides = [1, 1]} : vector<6x1xf32> to vector<2x1xf32>
    %17 = tpu.iota {dimensions = array<i32: 0>} : vector<6x16xi32>
    %c2_i32 = arith.constant 2 : i32
    %c0_i32 = arith.constant 0 : i32
    %18 = arith.cmpi eq, %c2_i32, %c0_i32 : i32
    %c1_i32 = arith.constant 1 : i32
    %19 = arith.select %18, %c1_i32, %c2_i32 : i32
    %20 = vector.broadcast %19 : i32 to vector<6x16xi32>
    %21 = arith.remsi %17, %20 : vector<6x16xi32>
    %c0_i32_5 = arith.constant 0 : i32
    %22 = vector.broadcast %c0_i32_5 : i32 to vector<6x16xi32>
    %23 = arith.cmpi ne, %21, %22 : vector<6x16xi32>
    %c0_i32_6 = arith.constant 0 : i32
    %24 = vector.broadcast %c0_i32_6 : i32 to vector<6x16xi32>
    %25 = arith.cmpi slt, %21, %24 : vector<6x16xi32>
    %c0_i32_7 = arith.constant 0 : i32
    %26 = arith.cmpi slt, %19, %c0_i32_7 : i32
    %27 = vector.broadcast %26 : i1 to vector<6x16xi1>
    %28 = vector.broadcast %27 : vector<6x16xi1> to vector<6x16xi1>
    %29 = arith.xori %25, %28 : vector<6x16xi1>
    %30 = arith.andi %29, %23 : vector<6x16xi1>
    %31 = vector.broadcast %19 : i32 to vector<6x16xi32>
    %32 = arith.addi %21, %31 : vector<6x16xi32>
    %33 = arith.select %30, %32, %21 : vector<6x16xi1>, vector<6x16xi32>
    %c0_i32_8 = arith.constant 0 : i32
    %34 = vector.broadcast %c0_i32_8 : i32 to vector<6x16xi32>
    %35 = arith.cmpi eq, %33, %34 : vector<6x16xi32>
    %cst_9 = arith.constant 0.000000e+00 : f32
    %36 = vector.broadcast %cst_9 : f32 to vector<2x16xf32>
    %cst_10 = arith.constant 0.000000e+00 : f32
    %37 = vector.broadcast %cst_10 : f32 to vector<10x16xf32>
    %38 = vector.extract_strided_slice %12 {offsets = [0, 0], sizes = [6, 16], strides = [1, 1]} : vector<6x80xf32> to vector<6x16xf32>
    %39 = vector.extract_strided_slice %12 {offsets = [0, 64], sizes = [6, 16], strides = [1, 1]} : vector<6x80xf32> to vector<6x16xf32>
    %40 = arith.select %35, %38, %39 : vector<6x16xi1>, vector<6x16xf32>
    %41 = tpu.concatenate %36, %36 in 0 : vector<2x16xf32>, vector<2x16xf32> -> vector<4x16xf32>
    %42 = vector.extract_strided_slice %40 {offsets = [0, 0], sizes = [4, 16], strides = [1, 1]} : vector<6x16xf32> to vector<4x16xf32>
    %43 = vector.broadcast %13 : vector<4x1xf32> to vector<4x16xf32>
    %44 = arith.mulf %41, %43 : vector<4x16xf32>
    %45 = arith.addf %42, %44 : vector<4x16xf32>
    %46 = vector.broadcast %14 : vector<4x1xf32> to vector<4x16xf32>
    %47 = arith.addf %45, %46 : vector<4x16xf32>
    %48 = arith.negf %47 : vector<4x16xf32>
    %49 = math.exp %48 : vector<4x16xf32>
    %cst_11 = arith.constant 1.000000e+00 : f32
    %50 = vector.broadcast %cst_11 : f32 to vector<4x16xf32>
    %51 = arith.addf %50, %49 : vector<4x16xf32>
    %52 = arith.divf %50, %51 : vector<4x16xf32>
    %53 = vector.extract_strided_slice %52 {offsets = [0, 0], sizes = [2, 16], strides = [1, 1]} : vector<4x16xf32> to vector<2x16xf32>
    %54 = vector.extract_strided_slice %52 {offsets = [2, 0], sizes = [2, 16], strides = [1, 1]} : vector<4x16xf32> to vector<2x16xf32>
    %55 = vector.extract_strided_slice %40 {offsets = [4, 0], sizes = [2, 16], strides = [1, 1]} : vector<6x16xf32> to vector<2x16xf32>
    %56 = vector.broadcast %15 : vector<2x1xf32> to vector<2x16xf32>
    %57 = arith.mulf %36, %56 : vector<2x16xf32>
    %58 = vector.broadcast %16 : vector<2x1xf32> to vector<2x16xf32>
    %59 = arith.addf %57, %58 : vector<2x16xf32>
    %60 = arith.mulf %53, %59 : vector<2x16xf32>
    %61 = arith.addf %55, %60 : vector<2x16xf32>
    %62 = math.tanh %61 : vector<2x16xf32>
    %cst_12 = arith.constant 1.000000e+00 : f32
    %63 = vector.broadcast %cst_12 : f32 to vector<2x16xf32>
    %64 = arith.subf %63, %54 : vector<2x16xf32>
    %65 = arith.mulf %64, %62 : vector<2x16xf32>
    %66 = arith.mulf %54, %36 : vector<2x16xf32>
    %67 = arith.addf %65, %66 : vector<2x16xf32>
    %68 = vector.extract_strided_slice %67 {offsets = [0, 0], sizes = [1, 16], strides = [1, 1]} : vector<2x16xf32> to vector<1x16xf32>
    %69 = vector.extract_strided_slice %5 {offsets = [0, 0], sizes = [10, 1], strides = [1, 1]} : vector<10x5xf32> to vector<10x1xf32>
    %70 = vector.broadcast %68 : vector<1x16xf32> to vector<10x16xf32>
    %71 = vector.broadcast %69 : vector<10x1xf32> to vector<10x16xf32>
    %72 = arith.mulf %70, %71 : vector<10x16xf32>
    %73 = arith.addf %37, %72 : vector<10x16xf32>
    %74 = vector.extract_strided_slice %67 {offsets = [1, 0], sizes = [1, 16], strides = [1, 1]} : vector<2x16xf32> to vector<1x16xf32>
    %75 = vector.extract_strided_slice %6 {offsets = [0, 4], sizes = [10, 1], strides = [1, 1]} : vector<10x5xf32> to vector<10x1xf32>
    %76 = vector.broadcast %74 : vector<1x16xf32> to vector<10x16xf32>
    %77 = vector.broadcast %75 : vector<10x1xf32> to vector<10x16xf32>
    %78 = arith.mulf %76, %77 : vector<10x16xf32>
    %79 = arith.addf %73, %78 : vector<10x16xf32>
    %80 = vector.extract_strided_slice %12 {offsets = [0, 16], sizes = [6, 16], strides = [1, 1]} : vector<6x80xf32> to vector<6x16xf32>
    %81 = vector.extract_strided_slice %12 {offsets = [0, 48], sizes = [6, 16], strides = [1, 1]} : vector<6x80xf32> to vector<6x16xf32>
    %82 = arith.select %35, %80, %81 : vector<6x16xi1>, vector<6x16xf32>
    %83 = tpu.concatenate %67, %67 in 0 : vector<2x16xf32>, vector<2x16xf32> -> vector<4x16xf32>
    %84 = vector.extract_strided_slice %82 {offsets = [0, 0], sizes = [4, 16], strides = [1, 1]} : vector<6x16xf32> to vector<4x16xf32>
    %85 = vector.broadcast %13 : vector<4x1xf32> to vector<4x16xf32>
    %86 = arith.mulf %83, %85 : vector<4x16xf32>
    %87 = arith.addf %84, %86 : vector<4x16xf32>
    %88 = vector.broadcast %14 : vector<4x1xf32> to vector<4x16xf32>
    %89 = arith.addf %87, %88 : vector<4x16xf32>
    %90 = arith.negf %89 : vector<4x16xf32>
    %91 = math.exp %90 : vector<4x16xf32>
    %cst_13 = arith.constant 1.000000e+00 : f32
    %92 = vector.broadcast %cst_13 : f32 to vector<4x16xf32>
    %93 = arith.addf %92, %91 : vector<4x16xf32>
    %94 = arith.divf %92, %93 : vector<4x16xf32>
    %95 = vector.extract_strided_slice %94 {offsets = [0, 0], sizes = [2, 16], strides = [1, 1]} : vector<4x16xf32> to vector<2x16xf32>
    %96 = vector.extract_strided_slice %94 {offsets = [2, 0], sizes = [2, 16], strides = [1, 1]} : vector<4x16xf32> to vector<2x16xf32>
    %97 = vector.extract_strided_slice %82 {offsets = [4, 0], sizes = [2, 16], strides = [1, 1]} : vector<6x16xf32> to vector<2x16xf32>
    %98 = vector.broadcast %15 : vector<2x1xf32> to vector<2x16xf32>
    %99 = arith.mulf %67, %98 : vector<2x16xf32>
    %100 = vector.broadcast %16 : vector<2x1xf32> to vector<2x16xf32>
    %101 = arith.addf %99, %100 : vector<2x16xf32>
    %102 = arith.mulf %95, %101 : vector<2x16xf32>
    %103 = arith.addf %97, %102 : vector<2x16xf32>
    %104 = math.tanh %103 : vector<2x16xf32>
    %cst_14 = arith.constant 1.000000e+00 : f32
    %105 = vector.broadcast %cst_14 : f32 to vector<2x16xf32>
    %106 = arith.subf %105, %96 : vector<2x16xf32>
    %107 = arith.mulf %106, %104 : vector<2x16xf32>
    %108 = arith.mulf %96, %67 : vector<2x16xf32>
    %109 = arith.addf %107, %108 : vector<2x16xf32>
    %110 = vector.extract_strided_slice %109 {offsets = [0, 0], sizes = [1, 16], strides = [1, 1]} : vector<2x16xf32> to vector<1x16xf32>
    %111 = vector.extract_strided_slice %5 {offsets = [0, 1], sizes = [10, 1], strides = [1, 1]} : vector<10x5xf32> to vector<10x1xf32>
    %112 = vector.broadcast %110 : vector<1x16xf32> to vector<10x16xf32>
    %113 = vector.broadcast %111 : vector<10x1xf32> to vector<10x16xf32>
    %114 = arith.mulf %112, %113 : vector<10x16xf32>
    %115 = arith.addf %79, %114 : vector<10x16xf32>
    %116 = vector.extract_strided_slice %109 {offsets = [1, 0], sizes = [1, 16], strides = [1, 1]} : vector<2x16xf32> to vector<1x16xf32>
    %117 = vector.extract_strided_slice %6 {offsets = [0, 3], sizes = [10, 1], strides = [1, 1]} : vector<10x5xf32> to vector<10x1xf32>
    %118 = vector.broadcast %116 : vector<1x16xf32> to vector<10x16xf32>
    %119 = vector.broadcast %117 : vector<10x1xf32> to vector<10x16xf32>
    %120 = arith.mulf %118, %119 : vector<10x16xf32>
    %121 = arith.addf %115, %120 : vector<10x16xf32>
    %122 = vector.extract_strided_slice %12 {offsets = [0, 32], sizes = [6, 16], strides = [1, 1]} : vector<6x80xf32> to vector<6x16xf32>
    %123 = vector.extract_strided_slice %12 {offsets = [0, 32], sizes = [6, 16], strides = [1, 1]} : vector<6x80xf32> to vector<6x16xf32>
    %124 = arith.select %35, %122, %123 : vector<6x16xi1>, vector<6x16xf32>
    %125 = tpu.concatenate %109, %109 in 0 : vector<2x16xf32>, vector<2x16xf32> -> vector<4x16xf32>
    %126 = vector.extract_strided_slice %124 {offsets = [0, 0], sizes = [4, 16], strides = [1, 1]} : vector<6x16xf32> to vector<4x16xf32>
    %127 = vector.broadcast %13 : vector<4x1xf32> to vector<4x16xf32>
    %128 = arith.mulf %125, %127 : vector<4x16xf32>
    %129 = arith.addf %126, %128 : vector<4x16xf32>
    %130 = vector.broadcast %14 : vector<4x1xf32> to vector<4x16xf32>
    %131 = arith.addf %129, %130 : vector<4x16xf32>
    %132 = arith.negf %131 : vector<4x16xf32>
    %133 = math.exp %132 : vector<4x16xf32>
    %cst_15 = arith.constant 1.000000e+00 : f32
    %134 = vector.broadcast %cst_15 : f32 to vector<4x16xf32>
    %135 = arith.addf %134, %133 : vector<4x16xf32>
    %136 = arith.divf %134, %135 : vector<4x16xf32>
    %137 = vector.extract_strided_slice %136 {offsets = [0, 0], sizes = [2, 16], strides = [1, 1]} : vector<4x16xf32> to vector<2x16xf32>
    %138 = vector.extract_strided_slice %136 {offsets = [2, 0], sizes = [2, 16], strides = [1, 1]} : vector<4x16xf32> to vector<2x16xf32>
    %139 = vector.extract_strided_slice %124 {offsets = [4, 0], sizes = [2, 16], strides = [1, 1]} : vector<6x16xf32> to vector<2x16xf32>
    %140 = vector.broadcast %15 : vector<2x1xf32> to vector<2x16xf32>
    %141 = arith.mulf %109, %140 : vector<2x16xf32>
    %142 = vector.broadcast %16 : vector<2x1xf32> to vector<2x16xf32>
    %143 = arith.addf %141, %142 : vector<2x16xf32>
    %144 = arith.mulf %137, %143 : vector<2x16xf32>
    %145 = arith.addf %139, %144 : vector<2x16xf32>
    %146 = math.tanh %145 : vector<2x16xf32>
    %cst_16 = arith.constant 1.000000e+00 : f32
    %147 = vector.broadcast %cst_16 : f32 to vector<2x16xf32>
    %148 = arith.subf %147, %138 : vector<2x16xf32>
    %149 = arith.mulf %148, %146 : vector<2x16xf32>
    %150 = arith.mulf %138, %109 : vector<2x16xf32>
    %151 = arith.addf %149, %150 : vector<2x16xf32>
    %152 = vector.extract_strided_slice %151 {offsets = [0, 0], sizes = [1, 16], strides = [1, 1]} : vector<2x16xf32> to vector<1x16xf32>
    %153 = vector.extract_strided_slice %5 {offsets = [0, 2], sizes = [10, 1], strides = [1, 1]} : vector<10x5xf32> to vector<10x1xf32>
    %154 = vector.broadcast %152 : vector<1x16xf32> to vector<10x16xf32>
    %155 = vector.broadcast %153 : vector<10x1xf32> to vector<10x16xf32>
    %156 = arith.mulf %154, %155 : vector<10x16xf32>
    %157 = arith.addf %121, %156 : vector<10x16xf32>
    %158 = vector.extract_strided_slice %151 {offsets = [1, 0], sizes = [1, 16], strides = [1, 1]} : vector<2x16xf32> to vector<1x16xf32>
    %159 = vector.extract_strided_slice %6 {offsets = [0, 2], sizes = [10, 1], strides = [1, 1]} : vector<10x5xf32> to vector<10x1xf32>
    %160 = vector.broadcast %158 : vector<1x16xf32> to vector<10x16xf32>
    %161 = vector.broadcast %159 : vector<10x1xf32> to vector<10x16xf32>
    %162 = arith.mulf %160, %161 : vector<10x16xf32>
    %163 = arith.addf %157, %162 : vector<10x16xf32>
    %164 = vector.extract_strided_slice %12 {offsets = [0, 48], sizes = [6, 16], strides = [1, 1]} : vector<6x80xf32> to vector<6x16xf32>
    %165 = vector.extract_strided_slice %12 {offsets = [0, 16], sizes = [6, 16], strides = [1, 1]} : vector<6x80xf32> to vector<6x16xf32>
    %166 = arith.select %35, %164, %165 : vector<6x16xi1>, vector<6x16xf32>
    %167 = tpu.concatenate %151, %151 in 0 : vector<2x16xf32>, vector<2x16xf32> -> vector<4x16xf32>
    %168 = vector.extract_strided_slice %166 {offsets = [0, 0], sizes = [4, 16], strides = [1, 1]} : vector<6x16xf32> to vector<4x16xf32>
    %169 = vector.broadcast %13 : vector<4x1xf32> to vector<4x16xf32>
    %170 = arith.mulf %167, %169 : vector<4x16xf32>
    %171 = arith.addf %168, %170 : vector<4x16xf32>
    %172 = vector.broadcast %14 : vector<4x1xf32> to vector<4x16xf32>
    %173 = arith.addf %171, %172 : vector<4x16xf32>
    %174 = arith.negf %173 : vector<4x16xf32>
    %175 = math.exp %174 : vector<4x16xf32>
    %cst_17 = arith.constant 1.000000e+00 : f32
    %176 = vector.broadcast %cst_17 : f32 to vector<4x16xf32>
    %177 = arith.addf %176, %175 : vector<4x16xf32>
    %178 = arith.divf %176, %177 : vector<4x16xf32>
    %179 = vector.extract_strided_slice %178 {offsets = [0, 0], sizes = [2, 16], strides = [1, 1]} : vector<4x16xf32> to vector<2x16xf32>
    %180 = vector.extract_strided_slice %178 {offsets = [2, 0], sizes = [2, 16], strides = [1, 1]} : vector<4x16xf32> to vector<2x16xf32>
    %181 = vector.extract_strided_slice %166 {offsets = [4, 0], sizes = [2, 16], strides = [1, 1]} : vector<6x16xf32> to vector<2x16xf32>
    %182 = vector.broadcast %15 : vector<2x1xf32> to vector<2x16xf32>
    %183 = arith.mulf %151, %182 : vector<2x16xf32>
    %184 = vector.broadcast %16 : vector<2x1xf32> to vector<2x16xf32>
    %185 = arith.addf %183, %184 : vector<2x16xf32>
    %186 = arith.mulf %179, %185 : vector<2x16xf32>
    %187 = arith.addf %181, %186 : vector<2x16xf32>
    %188 = math.tanh %187 : vector<2x16xf32>
    %cst_18 = arith.constant 1.000000e+00 : f32
    %189 = vector.broadcast %cst_18 : f32 to vector<2x16xf32>
    %190 = arith.subf %189, %180 : vector<2x16xf32>
    %191 = arith.mulf %190, %188 : vector<2x16xf32>
    %192 = arith.mulf %180, %151 : vector<2x16xf32>
    %193 = arith.addf %191, %192 : vector<2x16xf32>
    %194 = vector.extract_strided_slice %193 {offsets = [0, 0], sizes = [1, 16], strides = [1, 1]} : vector<2x16xf32> to vector<1x16xf32>
    %195 = vector.extract_strided_slice %5 {offsets = [0, 3], sizes = [10, 1], strides = [1, 1]} : vector<10x5xf32> to vector<10x1xf32>
    %196 = vector.broadcast %194 : vector<1x16xf32> to vector<10x16xf32>
    %197 = vector.broadcast %195 : vector<10x1xf32> to vector<10x16xf32>
    %198 = arith.mulf %196, %197 : vector<10x16xf32>
    %199 = arith.addf %163, %198 : vector<10x16xf32>
    %200 = vector.extract_strided_slice %193 {offsets = [1, 0], sizes = [1, 16], strides = [1, 1]} : vector<2x16xf32> to vector<1x16xf32>
    %201 = vector.extract_strided_slice %6 {offsets = [0, 1], sizes = [10, 1], strides = [1, 1]} : vector<10x5xf32> to vector<10x1xf32>
    %202 = vector.broadcast %200 : vector<1x16xf32> to vector<10x16xf32>
    %203 = vector.broadcast %201 : vector<10x1xf32> to vector<10x16xf32>
    %204 = arith.mulf %202, %203 : vector<10x16xf32>
    %205 = arith.addf %199, %204 : vector<10x16xf32>
    %206 = vector.extract_strided_slice %12 {offsets = [0, 64], sizes = [6, 16], strides = [1, 1]} : vector<6x80xf32> to vector<6x16xf32>
    %207 = vector.extract_strided_slice %12 {offsets = [0, 0], sizes = [6, 16], strides = [1, 1]} : vector<6x80xf32> to vector<6x16xf32>
    %208 = arith.select %35, %206, %207 : vector<6x16xi1>, vector<6x16xf32>
    %209 = tpu.concatenate %193, %193 in 0 : vector<2x16xf32>, vector<2x16xf32> -> vector<4x16xf32>
    %210 = vector.extract_strided_slice %208 {offsets = [0, 0], sizes = [4, 16], strides = [1, 1]} : vector<6x16xf32> to vector<4x16xf32>
    %211 = vector.broadcast %13 : vector<4x1xf32> to vector<4x16xf32>
    %212 = arith.mulf %209, %211 : vector<4x16xf32>
    %213 = arith.addf %210, %212 : vector<4x16xf32>
    %214 = vector.broadcast %14 : vector<4x1xf32> to vector<4x16xf32>
    %215 = arith.addf %213, %214 : vector<4x16xf32>
    %216 = arith.negf %215 : vector<4x16xf32>
    %217 = math.exp %216 : vector<4x16xf32>
    %cst_19 = arith.constant 1.000000e+00 : f32
    %218 = vector.broadcast %cst_19 : f32 to vector<4x16xf32>
    %219 = arith.addf %218, %217 : vector<4x16xf32>
    %220 = arith.divf %218, %219 : vector<4x16xf32>
    %221 = vector.extract_strided_slice %220 {offsets = [0, 0], sizes = [2, 16], strides = [1, 1]} : vector<4x16xf32> to vector<2x16xf32>
    %222 = vector.extract_strided_slice %220 {offsets = [2, 0], sizes = [2, 16], strides = [1, 1]} : vector<4x16xf32> to vector<2x16xf32>
    %223 = vector.extract_strided_slice %208 {offsets = [4, 0], sizes = [2, 16], strides = [1, 1]} : vector<6x16xf32> to vector<2x16xf32>
    %224 = vector.broadcast %15 : vector<2x1xf32> to vector<2x16xf32>
    %225 = arith.mulf %193, %224 : vector<2x16xf32>
    %226 = vector.broadcast %16 : vector<2x1xf32> to vector<2x16xf32>
    %227 = arith.addf %225, %226 : vector<2x16xf32>
    %228 = arith.mulf %221, %227 : vector<2x16xf32>
    %229 = arith.addf %223, %228 : vector<2x16xf32>
    %230 = math.tanh %229 : vector<2x16xf32>
    %cst_20 = arith.constant 1.000000e+00 : f32
    %231 = vector.broadcast %cst_20 : f32 to vector<2x16xf32>
    %232 = arith.subf %231, %222 : vector<2x16xf32>
    %233 = arith.mulf %232, %230 : vector<2x16xf32>
    %234 = arith.mulf %222, %193 : vector<2x16xf32>
    %235 = arith.addf %233, %234 : vector<2x16xf32>
    %236 = vector.extract_strided_slice %235 {offsets = [0, 0], sizes = [1, 16], strides = [1, 1]} : vector<2x16xf32> to vector<1x16xf32>
    %237 = vector.extract_strided_slice %5 {offsets = [0, 4], sizes = [10, 1], strides = [1, 1]} : vector<10x5xf32> to vector<10x1xf32>
    %238 = vector.broadcast %236 : vector<1x16xf32> to vector<10x16xf32>
    %239 = vector.broadcast %237 : vector<10x1xf32> to vector<10x16xf32>
    %240 = arith.mulf %238, %239 : vector<10x16xf32>
    %241 = arith.addf %205, %240 : vector<10x16xf32>
    %242 = vector.extract_strided_slice %235 {offsets = [1, 0], sizes = [1, 16], strides = [1, 1]} : vector<2x16xf32> to vector<1x16xf32>
    %243 = vector.extract_strided_slice %6 {offsets = [0, 0], sizes = [10, 1], strides = [1, 1]} : vector<10x5xf32> to vector<10x1xf32>
    %244 = vector.broadcast %242 : vector<1x16xf32> to vector<10x16xf32>
    %245 = vector.broadcast %243 : vector<10x1xf32> to vector<10x16xf32>
    %246 = arith.mulf %244, %245 : vector<10x16xf32>
    %247 = arith.addf %241, %246 : vector<10x16xf32>
    %248 = vector.broadcast %4 : vector<10x1xf32> to vector<10x16xf32>
    %249 = arith.addf %247, %248 : vector<10x16xf32>
    %c0_21 = arith.constant 0 : index
    %c0_22 = arith.constant 0 : index
    %250 = vector.load %arg3[%c0_21, %c0_22] : memref<10x16xf32, #tpu.memory_space<vmem>>, vector<10x16xf32>
    tpu.vector_store %arg3[%c0_21, %c0_22], %249 {strides = array<i32>} : memref<10x16xf32, #tpu.memory_space<vmem>>, vector<10x16xf32>,
    %251 = tpu.iota {dimensions = array<i32: 0>} : vector<10x16xi32>
    %cst_23 = arith.constant dense<0xFF800000> : vector<16xf32>
    %252 = vector.multi_reduction <maximumf>, %249, %cst_23 [0] : vector<10x16xf32> to vector<16xf32>
    %253 = vector.shape_cast %252 : vector<16xf32> to vector<1x16xf32>
    %254 = vector.broadcast %253 : vector<1x16xf32> to vector<10x16xf32>
    %255 = arith.cmpf oeq, %249, %254 : vector<10x16xf32>
    %c10_i32 = arith.constant 10 : i32
    %256 = vector.broadcast %c10_i32 : i32 to vector<10x16xi32>
    %257 = arith.select %255, %251, %256 : vector<10x16xi1>, vector<10x16xi32>
    %cst_24 = arith.constant dense<2147483647> : vector<16xi32>
    %258 = vector.multi_reduction <minsi>, %257, %cst_24 [0] : vector<10x16xi32> to vector<16xi32>
    %259 = vector.shape_cast %258 : vector<16xi32> to vector<1x16xi32>
    %c0_25 = arith.constant 0 : index
    %c0_26 = arith.constant 0 : index
    %260 = vector.load %arg4[%c0_25, %c0_26] : memref<1x16xi32, #tpu.memory_space<vmem>>, vector<1x16xi32>
    tpu.vector_store %arg4[%c0_25, %c0_26], %259 {strides = array<i32>} : memref<1x16xi32, #tpu.memory_space<vmem>>, vector<1x16xi32>,
    return
  }
}

</mosaic_0001>

<llo_original>
// kernel: top_gru_forward.1
$region0: #{top_gru_forward.1}
  #allocation0 [shape = 'u32[]', space=smem, size = 0x4, offset = 0x4, fixed_abs, tag = 'smem constant byte address 0x4 - core index']
  #allocation1 [shape = 'u32[144,128]{1,0:T(1,128)}', space=vmem, size = 0x12000, scoped, tag = 'internal scratch']
  %s0 = inlined_call_operand.vmem [shape: f32[32,80], index: 0, kind: input, shape index: {}]
  %s1 = inlined_call_operand.vmem [shape: f32[8,32], index: 1, kind: input, shape index: {}]
  %s2 = inlined_call_operand.vmem [shape: f32[10,14], index: 2, kind: input, shape index: {}]
  %s3 = inlined_call_operand.vmem [shape: f32[10,16], index: 3, kind: output, shape index: {0}]
  %s4 = inlined_call_operand.hbm [shape: s32[1,16], index: 4, kind: output, shape index: {1}]
  %5 = xla_tuple %s3, %s4
  %s6 = sld [smem:[#allocation0]]
  $region30: #{top_gru_forward.1} parent=0
    _
  %s8 = ssub.s32 1, %s6
  %s9 = scalar_select 0, %s8, %s6
  $region1: #{top_gru_forward.1} parent=0
    #allocation2 [shape = 'u8[512]{0}', space=vmem, size = 0x400, scoped, tag = 'output window, operand 1, single buffered']
    #allocation3 [shape = 's32[1]{0}', space=sflag, size = 0x4, scoped, tag = 'scoped memory for top_gru_forward.1']
    %10 = vsyncpa [#allocation3], 0
    // Predicated region
    $region2: #{top_gru_forward.1} parent=1 // pred_check
      _
    $region3: #{top_gru_forward.1} parent=1 // pred_check_branch
      %12 = sbr.rel (0) target = $region5
    $region4: #{top_gru_forward.1} parent=1 // pred_region
      _
    $region5: #{top_gru_forward.1} parent=1 // pred_fallthru
      _
    // Predicated region
    $region6: #{top_gru_forward.1} parent=1 // pred_check
      _
    $region7: #{top_gru_forward.1} parent=1 // pred_check_branch
      %14 = sbr.rel (0) target = $region9
    $region8: #{top_gru_forward.1} parent=1 // pred_region
      _
    $region9: #{top_gru_forward.1} parent=1 // pred_fallthru
      _
    // Predicated region
    $region10: #{top_gru_forward.1} parent=1 // pred_check
      _
    $region11: #{top_gru_forward.1} parent=1 // pred_check_branch
      %16 = sbr.rel (0) target = $region13
    $region12: #{top_gru_forward.1} parent=1 // pred_region
      _
    $region13: #{top_gru_forward.1} parent=1 // pred_fallthru
      _
    %v17 = vld [vmem:[%s2] sm:$0xff]
    %v18 = vld [vmem:[%s2 + $0x8] sm:$0x3]
    %v19 = vld [vmem:[%s1] sm:$0xff]
    %v20 = vld [vmem:[%s0] sm:$0xff]
    %v21 = vld [vmem:[%s0 + $0x8] sm:$0xff]
    %v22 = vld [vmem:[%s0 + $0x10] sm:$0xff]
    %v23 = vld [vmem:[%s0 + $0x18] sm:$0xff]
    %vm24 = vcmask 261120
    %v26 = vsel %vm24, %v19, 0
    %28 = vmatprep.subr.mxu0 0.0
    %29 = vmatpush1.msra.mxu0 0.0
    %30 = vmatprep.subr.mxu0 0.0
    %31 = vmatpush1.msra.mxu0 0.0
    %32 = vmatprep.subr.mxu0 0.0
    %33 = vmatpush1.msra.mxu0 0.0
    %34 = vmatprep.subr.mxu0 0.0
    %35 = vmatpush1.msra.mxu0 0.0
    %36 = vmatprep.subr.mxu0 0.0
    %37 = vmatpush1.msra.mxu0 0.0
    %38 = vmatprep.subr.mxu0 0.0
    %39 = vmatpush1.msra.mxu0 0.0
    %40 = vmatprep.subr.mxu0 0.0
    %41 = vmatpush1.msra.mxu0 0.0
    %42 = vmatprep.subr.mxu0 0.0
    %43 = vmatpush1.msra.mxu0 0.0
    %44 = vmatprep.subr.mxu0 0.0
    %45 = vmatpush1.msra.mxu0 0.0
    %46 = vmatprep.subr.mxu0 0.0
    %47 = vmatpush1.msra.mxu0 0.0
    %48 = vmatprep.subr.mxu0 0.0
    %49 = vmatpush1.msra.mxu0 0.0
    %50 = vmatprep.subr.mxu0 0.0
    %51 = vmatpush1.msra.mxu0 0.0
    %52 = vmatprep.subr.mxu0 0.0
    %53 = vmatpush1.msra.mxu0 %v23
    %54 = vmatprep.subr.mxu0 0.0
    %55 = vmatpush1.msra.mxu0 %v22
    %56 = vmatprep.subr.mxu0 0.0
    %57 = vmatpush1.msra.mxu0 %v21
    %58 = vmatprep.subr.mxu0 0.0
    %59 = vmatpush1.msra.mxu0 %v20
    %60 = vmatprep.subr.mxu0 0.0
    %61 = vmatpush2.msra.mxu0 0.0
    %62 = vmatprep.subr.mxu0 0.0
    %63 = vmatpush2.msra.mxu0 0.0
    %64 = vmatprep.subr.mxu0 0.0
    %65 = vmatpush2.msra.mxu0 0.0
    %66 = vmatprep.subr.mxu0 0.0
    %67 = vmatpush2.msra.mxu0 0.0
    %68 = vmatprep.subr.mxu0 0.0
    %69 = vmatpush2.msra.mxu0 0.0
    %70 = vmatprep.subr.mxu0 0.0
    %71 = vmatpush2.msra.mxu0 0.0
    %72 = vmatprep.subr.mxu0 0.0
    %73 = vmatpush2.msra.mxu0 0.0
    %74 = vmatprep.subr.mxu0 0.0
    %75 = vmatpush2.msra.mxu0 0.0
    %76 = vmatprep.subr.mxu0 0.0
    %77 = vmatpush2.msra.mxu0 0.0
    %78 = vmatprep.subr.mxu0 0.0
    %79 = vmatpush2.msra.mxu0 0.0
    %80 = vmatprep.subr.mxu0 0.0
    %81 = vmatpush2.msra.mxu0 0.0
    %82 = vmatprep.subr.mxu0 0.0
    %83 = vmatpush2.msra.mxu0 0.0
    %84 = vmatprep.subr.mxu0 0.0
    %85 = vmatpush2.msra.mxu0 0.0
    %86 = vmatprep.subr.mxu0 0.0
    %87 = vmatpush2.msra.mxu0 0.0
    %88 = vmatprep.subr.mxu0 0.0
    %89 = vmatpush2.msra.mxu0 0.0
    %90 = vmatprep.subr.mxu0 0.0
    %91 = vmatpush2.msra.mxu0 0.0
    %92 = vmatprep.mubr.f32.mxu0 0.0
    %93 = vmatmul.mubr.f32.gmra.mxu0 %v26
    %v94 = vpop.f32.mrf.mxu0
    %v95 = vadd.f32 0.0, %v94
    %v96 = vpop.f32.mrf.mxu0
    %97 = vdwg.mxu0
    %99 = vset.pattern.permute.xlu0 0
    %100 = vperm.xlu0 %99, %v17
    %v101 = vpop.permute.xlu0 %100
    %v103 = vadd.f32 %v95, %v101
    %v104 = vlaneseq
    %v105 = vshrl.u32 %v104, 7
    %vm106 = vcmp.lt.s32.totalorder %v105, 0
    %v107 = vsub.s32 0, %v105
    %v108 = vsel %vm106, %v107, %v105
    %v109 = vshrl.u32 %v108, 1
    %v110 = vand.u32 %v108, 1
    %v111 = vsub.s32 0, %v110
    %v112 = vsel %vm106, %v111, %v110
    %vm113 = vcmp.ne.s32.totalorder %v112, 0
    %vm114 = vcmp.lt.s32.totalorder %v112, 0
    %vm115 = vmand %vm114, %vm113
    %v116 = vadd.s32 %v112, 2
    %v117 = vsel %vm115, %v116, %v112
    %vm118 = vcmp.eq.s32.totalorder %v117, 0
    %120 = vrot.lane.b32.xlu0 %v103, 64
    %v121 = vpop.permute.xlu0 %120
    %v123 = vsel %vm118, %v103, %v121
    %124 = vset.pattern.permute.xlu0 1
    %125 = vperm.xlu0 %124, %v17
    %v126 = vpop.permute.xlu0 %125
    %v128 = vmul.f32 %v126, 0.0
    %v129 = vadd.f32 %v123, %v128
    %130 = vset.pattern.permute.xlu0 2
    %131 = vperm.xlu0 %130, %v17
    %v132 = vpop.permute.xlu0 %131
    %v134 = vadd.f32 %v129, %v132
    %v135 = vxor.u32 %v134, 2147483648
    %v136 = vmul.f32 %v135, 1.442695
    %v137 = vpow.pop %v136
    %v138 = vadd.f32 %v137, 1.0
    %v139 = vrcp.pop %v138
    %v140 = vmul.f32 1.0, %v139
    %v141 = vadd.f32 %v128, %v132
    %v143 = vrot.slane %v141, 4
    %v145 = vmul.f32 %v140, %v143
    %v147 = vrot.slane %v145, 4
    %v149 = vadd.f32 %v123, %v147
    %v150 = vtanh.pop %v149
    %v151 = vsub.f32 1.0, %v140
    %v153 = vrot.slane %v150, 2
    %v155 = vmul.f32 %v151, %v153
    %v156 = vmul.f32 %v140, 0.0
    %v157 = vadd.f32 %v155, %v156
    %v158 = vlaneseq
    %v159 = vshrl.u32 %v158, 7
    %v160 = vsub.s32 2, %v159
    %v161 = vrot.slane %v157, %v160
    %162 = vset.pattern.permute.xlu0 4
    %163 = vperm.xlu0 %162, %v17
    %v164 = vpop.permute.xlu0 %163
    %167 = vset.pattern.permute.xlu0 4
    %168 = vperm.xlu0 %167, %v18
    %v169 = vpop.permute.xlu0 %168
    %v171 = vmul.f32 %v161, %v164
    %v172 = vmul.f32 %v161, %v169
    %v173 = vadd.f32 %v171, 0.0
    %v174 = vadd.f32 %v172, 0.0
    %v175 = vlaneseq
    %v176 = vshrl.u32 %v175, 7
    %v177 = vsub.s32 3, %v176
    %v178 = vrot.slane %v157, %v177
    %179 = vset.pattern.permute.xlu0 13
    %180 = vperm.xlu0 %179, %v17
    %v181 = vpop.permute.xlu0 %180
    %183 = vset.pattern.permute.xlu0 13
    %184 = vperm.xlu0 %183, %v18
    %v185 = vpop.permute.xlu0 %184
    %v187 = vmul.f32 %v178, %v181
    %v188 = vmul.f32 %v178, %v185
    %v189 = vadd.f32 %v173, %v187
    %v190 = vadd.f32 %v174, %v188
    %191 = vrot.lane.b32.xlu0 %v103, 96
    %v192 = vpop.permute.xlu0 %191
    %v194 = vsel %vm118, %v103, %v192
    %v196 = vrot.slane %v157, 2
    %vm198 = vcmask 1041408
    %v199 = vsel %vm198, %v196, %v157
    %v200 = vmul.f32 %v199, %v126
    %202 = vrot.lane.b32.xlu0 %v200, 16
    %v203 = vpop.permute.xlu0 %202
    %v205 = vadd.f32 %v194, %v203
    %v206 = vadd.f32 %v205, %v132
    %v207 = vxor.u32 %v206, 2147483648
    %v208 = vmul.f32 %v207, 1.442695
    %v209 = vpow.pop %v208
    %v210 = vadd.f32 %v209, 1.0
    %v211 = vrcp.pop %v210
    %v212 = vmul.f32 1.0, %v211
    %v213 = vrot.slane %v126, 2
    %v215 = vmul.f32 %v157, %v213
    %v216 = vrot.slane %v132, 2
    %v218 = vadd.f32 %v215, %v216
    %v220 = vrot.slane %v218, 2
    %221 = vrot.lane.b32.xlu0 %v220, 16
    %v222 = vpop.permute.xlu0 %221
    %v224 = vmul.f32 %v212, %v222
    %v226 = vrot.slane %v224, 4
    %v228 = vadd.f32 %v194, %v226
    %v229 = vtanh.pop %v228
    %v230 = vsub.f32 1.0, %v212
    %v232 = vrot.slane %v229, 2
    %v234 = vmul.f32 %v230, %v232
    %235 = vrot.lane.b32.xlu0 %v157, 16
    %v236 = vpop.permute.xlu0 %235
    %v238 = vmul.f32 %v212, %v236
    %v239 = vadd.f32 %v234, %v238
    %v240 = vlaneseq
    %v241 = vshrl.u32 %v240, 7
    %v242 = vsub.s32 2, %v241
    %v243 = vrot.slane %v239, %v242
    %244 = vset.pattern.permute.xlu0 5
    %245 = vperm.xlu0 %244, %v17
    %v246 = vpop.permute.xlu0 %245
    %248 = vset.pattern.permute.xlu0 5
    %249 = vperm.xlu0 %248, %v18
    %v250 = vpop.permute.xlu0 %249
    %v252 = vmul.f32 %v243, %v246
    %v253 = vmul.f32 %v243, %v250
    %256 = vrot.lane.b32.xlu0 %v252, 112
    %v257 = vpop.permute.xlu0 %256
    %258 = vrot.lane.b32.xlu0 %v253, 112
    %v259 = vpop.permute.xlu0 %258
    %v262 = vadd.f32 %v189, %v257
    %v263 = vadd.f32 %v190, %v259
    %v264 = vlaneseq
    %v265 = vshrl.u32 %v264, 7
    %v266 = vsub.s32 3, %v265
    %v267 = vrot.slane %v239, %v266
    %268 = vset.pattern.permute.xlu0 12
    %269 = vperm.xlu0 %268, %v17
    %v270 = vpop.permute.xlu0 %269
    %272 = vset.pattern.permute.xlu0 12
    %273 = vperm.xlu0 %272, %v18
    %v274 = vpop.permute.xlu0 %273
    %v276 = vmul.f32 %v267, %v270
    %v277 = vmul.f32 %v267, %v274
    %280 = vrot.lane.b32.xlu0 %v276, 112
    %v281 = vpop.permute.xlu0 %280
    %282 = vrot.lane.b32.xlu0 %v277, 112
    %v283 = vpop.permute.xlu0 %282
    %v286 = vadd.f32 %v262, %v281
    %v287 = vadd.f32 %v263, %v283
    %v289 = vrot.slane %v239, 2
    %v291 = vsel %vm198, %v289, %v239
    %v292 = vmul.f32 %v291, %v126
    %294 = vrot.lane.b32.xlu0 %v292, 16
    %v295 = vpop.permute.xlu0 %294
    %v297 = vadd.f32 %v103, %v295
    %v298 = vadd.f32 %v297, %v132
    %v299 = vxor.u32 %v298, 2147483648
    %v300 = vmul.f32 %v299, 1.442695
    %v301 = vpow.pop %v300
    %v302 = vadd.f32 %v301, 1.0
    %v303 = vrcp.pop %v302
    %v304 = vmul.f32 1.0, %v303
    %v305 = vmul.f32 %v239, %v213
    %v306 = vadd.f32 %v305, %v216
    %v308 = vrot.slane %v306, 2
    %309 = vrot.lane.b32.xlu0 %v308, 16
    %v310 = vpop.permute.xlu0 %309
    %v312 = vmul.f32 %v304, %v310
    %v314 = vrot.slane %v312, 4
    %v316 = vadd.f32 %v103, %v314
    %v317 = vtanh.pop %v316
    %v318 = vsub.f32 1.0, %v304
    %v320 = vrot.slane %v317, 2
    %v322 = vmul.f32 %v318, %v320
    %323 = vrot.lane.b32.xlu0 %v239, 16
    %v324 = vpop.permute.xlu0 %323
    %v326 = vmul.f32 %v304, %v324
    %v327 = vadd.f32 %v322, %v326
    %v328 = vlaneseq
    %v329 = vshrl.u32 %v328, 7
    %v330 = vsub.s32 2, %v329
    %v331 = vrot.slane %v327, %v330
    %332 = vset.pattern.permute.xlu0 6
    %333 = vperm.xlu0 %332, %v17
    %v334 = vpop.permute.xlu0 %333
    %336 = vset.pattern.permute.xlu0 6
    %337 = vperm.xlu0 %336, %v18
    %v338 = vpop.permute.xlu0 %337
    %v340 = vmul.f32 %v331, %v334
    %v341 = vmul.f32 %v331, %v338
    %344 = vrot.lane.b32.xlu0 %v340, 96
    %v345 = vpop.permute.xlu0 %344
    %346 = vrot.lane.b32.xlu0 %v341, 96
    %v347 = vpop.permute.xlu0 %346
    %v350 = vadd.f32 %v286, %v345
    %v351 = vadd.f32 %v287, %v347
    %v352 = vlaneseq
    %v353 = vshrl.u32 %v352, 7
    %v354 = vsub.s32 3, %v353
    %v355 = vrot.slane %v327, %v354
    %356 = vset.pattern.permute.xlu0 11
    %357 = vperm.xlu0 %356, %v17
    %v358 = vpop.permute.xlu0 %357
    %360 = vset.pattern.permute.xlu0 11
    %361 = vperm.xlu0 %360, %v18
    %v362 = vpop.permute.xlu0 %361
    %v364 = vmul.f32 %v355, %v358
    %v365 = vmul.f32 %v355, %v362
    %368 = vrot.lane.b32.xlu0 %v364, 96
    %v369 = vpop.permute.xlu0 %368
    %370 = vrot.lane.b32.xlu0 %v365, 96
    %v371 = vpop.permute.xlu0 %370
    %v374 = vadd.f32 %v350, %v369
    %v375 = vadd.f32 %v351, %v371
    %376 = vrot.lane.b32.xlu0 %v103, 32
    %v377 = vpop.permute.xlu0 %376
    %v379 = vsel %vm118, %v103, %v377
    %v381 = vrot.slane %v327, 2
    %v383 = vsel %vm198, %v381, %v327
    %v384 = vmul.f32 %v383, %v126
    %386 = vrot.lane.b32.xlu0 %v384, 16
    %v387 = vpop.permute.xlu0 %386
    %v389 = vadd.f32 %v379, %v387
    %v390 = vadd.f32 %v389, %v132
    %v391 = vxor.u32 %v390, 2147483648
    %v392 = vmul.f32 %v391, 1.442695
    %v393 = vpow.pop %v392
    %v394 = vadd.f32 %v393, 1.0
    %v395 = vrcp.pop %v394
    %v396 = vmul.f32 1.0, %v395
    %v397 = vmul.f32 %v327, %v213
    %v398 = vadd.f32 %v397, %v216
    %v400 = vrot.slane %v398, 2
    %401 = vrot.lane.b32.xlu0 %v400, 16
    %v402 = vpop.permute.xlu0 %401
    %v404 = vmul.f32 %v396, %v402
    %v406 = vrot.slane %v404, 4
    %v408 = vadd.f32 %v379, %v406
    %v409 = vtanh.pop %v408
    %v410 = vsub.f32 1.0, %v396
    %v412 = vrot.slane %v409, 2
    %v414 = vmul.f32 %v410, %v412
    %415 = vrot.lane.b32.xlu0 %v327, 16
    %v416 = vpop.permute.xlu0 %415
    %v418 = vmul.f32 %v396, %v416
    %v419 = vadd.f32 %v414, %v418
    %v420 = vlaneseq
    %v421 = vshrl.u32 %v420, 7
    %v422 = vsub.s32 2, %v421
    %v423 = vrot.slane %v419, %v422
    %424 = vset.pattern.permute.xlu0 7
    %425 = vperm.xlu0 %424, %v17
    %v426 = vpop.permute.xlu0 %425
    %428 = vset.pattern.permute.xlu0 7
    %429 = vperm.xlu0 %428, %v18
    %v430 = vpop.permute.xlu0 %429
    %v432 = vmul.f32 %v423, %v426
    %v433 = vmul.f32 %v423, %v430
    %436 = vrot.lane.b32.xlu0 %v432, 80
    %v437 = vpop.permute.xlu0 %436
    %438 = vrot.lane.b32.xlu0 %v433, 80
    %v439 = vpop.permute.xlu0 %438
    %v442 = vadd.f32 %v374, %v437
    %v443 = vadd.f32 %v375, %v439
    %v444 = vlaneseq
    %v445 = vshrl.u32 %v444, 7
    %v446 = vsub.s32 3, %v445
    %v447 = vrot.slane %v419, %v446
    %448 = vset.pattern.permute.xlu0 10
    %449 = vperm.xlu0 %448, %v17
    %v450 = vpop.permute.xlu0 %449
    %452 = vset.pattern.permute.xlu0 10
    %453 = vperm.xlu0 %452, %v18
    %v454 = vpop.permute.xlu0 %453
    %v456 = vmul.f32 %v447, %v450
    %v457 = vmul.f32 %v447, %v454
    %460 = vrot.lane.b32.xlu0 %v456, 80
    %v461 = vpop.permute.xlu0 %460
    %462 = vrot.lane.b32.xlu0 %v457, 80
    %v463 = vpop.permute.xlu0 %462
    %v466 = vadd.f32 %v442, %v461
    %v467 = vadd.f32 %v443, %v463
    %v469 = vrot.slane %v419, 2
    %v471 = vsel %vm198, %v469, %v419
    %v472 = vmul.f32 %v471, %v126
    %474 = vrot.lane.b32.xlu0 %v472, 16
    %v475 = vpop.permute.xlu0 %474
    %v477 = vadd.f32 %v123, %v475
    %v478 = vadd.f32 %v477, %v132
    %v479 = vxor.u32 %v478, 2147483648
    %v480 = vmul.f32 %v479, 1.442695
    %v481 = vpow.pop %v480
    %v482 = vadd.f32 %v481, 1.0
    %v483 = vrcp.pop %v482
    %v484 = vmul.f32 1.0, %v483
    %v485 = vmul.f32 %v419, %v213
    %v486 = vadd.f32 %v485, %v216
    %v488 = vrot.slane %v486, 2
    %489 = vrot.lane.b32.xlu0 %v488, 16
    %v490 = vpop.permute.xlu0 %489
    %v492 = vmul.f32 %v484, %v490
    %v494 = vrot.slane %v492, 4
    %v496 = vadd.f32 %v123, %v494
    %v497 = vtanh.pop %v496
    %v498 = vsub.f32 1.0, %v484
    %v500 = vrot.slane %v497, 2
    %v502 = vmul.f32 %v498, %v500
    %503 = vrot.lane.b32.xlu0 %v419, 16
    %v504 = vpop.permute.xlu0 %503
    %v506 = vmul.f32 %v484, %v504
    %v507 = vadd.f32 %v502, %v506
    %v508 = vlaneseq
    %v509 = vshrl.u32 %v508, 7
    %v510 = vsub.s32 2, %v509
    %v511 = vrot.slane %v507, %v510
    %512 = vset.pattern.permute.xlu0 8
    %513 = vperm.xlu0 %512, %v17
    %v514 = vpop.permute.xlu0 %513
    %516 = vset.pattern.permute.xlu0 8
    %517 = vperm.xlu0 %516, %v18
    %v518 = vpop.permute.xlu0 %517
    %v520 = vmul.f32 %v511, %v514
    %v521 = vmul.f32 %v511, %v518
    %524 = vrot.lane.b32.xlu0 %v520, 64
    %v525 = vpop.permute.xlu0 %524
    %526 = vrot.lane.b32.xlu0 %v521, 64
    %v527 = vpop.permute.xlu0 %526
    %v530 = vadd.f32 %v466, %v525
    %v531 = vadd.f32 %v467, %v527
    %v532 = vlaneseq
    %v533 = vshrl.u32 %v532, 7
    %v534 = vsub.s32 3, %v533
    %v535 = vrot.slane %v507, %v534
    %536 = vset.pattern.permute.xlu0 9
    %537 = vperm.xlu0 %536, %v17
    %v538 = vpop.permute.xlu0 %537
    %540 = vset.pattern.permute.xlu0 9
    %541 = vperm.xlu0 %540, %v18
    %v542 = vpop.permute.xlu0 %541
    %v544 = vmul.f32 %v535, %v538
    %v545 = vmul.f32 %v535, %v542
    %548 = vrot.lane.b32.xlu0 %v544, 64
    %v549 = vpop.permute.xlu0 %548
    %550 = vrot.lane.b32.xlu0 %v545, 64
    %v551 = vpop.permute.xlu0 %550
    %v554 = vadd.f32 %v530, %v549
    %v555 = vadd.f32 %v531, %v551
    %556 = vset.pattern.permute.xlu0 3
    %557 = vperm.xlu0 %556, %v17
    %v558 = vpop.permute.xlu0 %557
    %560 = vset.pattern.permute.xlu0 3
    %561 = vperm.xlu0 %560, %v18
    %v562 = vpop.permute.xlu0 %561
    %v564 = vadd.f32 %v554, %v558
    %v565 = vadd.f32 %v555, %v562
    %vm566 = vcmask 130048
    %567 = vst.msk [vmem:[%s3] sm:$0xff] %vm566, %v564
    %vm568 = vcmask 123904
    %569 = vst.msk [vmem:[%s3 + $0x8] sm:$0x3] %vm568, %v565
    %v570 = vadd.s32 %v105, 8
    %v571 = vsel %vm566, %v564, -inf
    %v572 = vsel %vm568, %v565, -inf
    %v573 = vmax.f32 %v571, %v572
    %v574 = vrot.slane %v573, 4
    %v575 = vmax.f32 %v573, %v574
    %v576 = vrot.slane %v575, 2
    %v577 = vmax.f32 %v575, %v576
    %v578 = vrot.slane %v577, 1
    %v579 = vmax.f32 %v577, %v578
    %vm580 = vcmp.eq.f32.partialorder %v564, %v579
    %vm581 = vcmp.eq.f32.partialorder %v565, %v579
    %v582 = vsel %vm580, %v105, 10
    %v583 = vsel %vm581, %v570, 10
    %v584 = vsel %vm566, %v582, 2147483647
    %v585 = vsel %vm568, %v583, 2147483647
    %vm586 = vcmp.lt.s32.totalorder %v584, %v585
    %v587 = vsel %vm586, %v584, %v585
    %v588 = vrot.slane %v587, 4
    %vm589 = vcmp.lt.s32.totalorder %v587, %v588
    %v590 = vsel %vm589, %v587, %v588
    %v591 = vrot.slane %v590, 2
    %vm592 = vcmp.lt.s32.totalorder %v590, %v591
    %v593 = vsel %vm592, %v590, %v591
    %v594 = vrot.slane %v593, 1
    %vm595 = vcmp.lt.s32.totalorder %v593, %v594
    %v596 = vsel %vm595, %v593, %v594
    %vm597 = vcmask 122880
    %598 = vst.msk [vmem:[#allocation2] sm:$0x1] %vm597, %v596
    // Predicated region
    $region14: #{top_gru_forward.1} parent=1 // pred_check
      _
    $region15: #{top_gru_forward.1} parent=1 // pred_check_branch
      %600 = sbr.rel (0) target = $region17
    $region16: #{top_gru_forward.1} parent=1 // pred_region
      _
    $region17: #{top_gru_forward.1} parent=1 // pred_fallthru
      _
    // Predicated region
    $region18: #{top_gru_forward.1} parent=1 // pred_check
      _
    $region19: #{top_gru_forward.1} parent=1 // pred_check_branch
      %602 = sbr.rel (0) target = $region21
    $region20: #{top_gru_forward.1} parent=1 // pred_region
      %s604 = ssub.s32 16, 16
      %605 = vsyncadd [#allocation3], %s604
      %s607 = sshll.u32 [#allocation2], 4
      %s608 = int_to_ptr.vmem [resolvable:$true] %s607
      %610 = dma.vmem_to_hbm [thread:$0]  %s608, 16, %s4, [#allocation3]
    $region21: #{top_gru_forward.1} parent=1 // pred_fallthru
      _
    // Predicated region
    $region22: #{top_gru_forward.1} parent=1 // pred_check
      _
    $region23: #{top_gru_forward.1} parent=1 // pred_check_branch
      %612 = sbr.rel (0) target = $region25
    $region24: #{top_gru_forward.1} parent=1 // pred_region
      _
    $region25: #{top_gru_forward.1} parent=1 // pred_fallthru
      _
    // Predicated region
    $region26: #{top_gru_forward.1} parent=1 // pred_check
      _
    $region27: #{top_gru_forward.1} parent=1 // pred_check_branch
      %614 = sbr.rel (0) target = $region29
    $region28: #{top_gru_forward.1} parent=1 // pred_region
      %615 = dma.done [#allocation3], 16
    $region29: #{top_gru_forward.1} parent=1 // pred_fallthru
      _
    %616 = vsyncpa [#allocation3], 1

</llo_original>
